<compile_context>
chip_gen: v6e
topology: v6e:2x2x1
jax: 0.10.0
libtpu: 0.0.40
codegen_flags: <defaults>
</compile_context>

<pallas_src>
import functools

import jax
import jax.numpy as jnp
from jax.experimental import pallas as pl
from jax.experimental.pallas import tpu as pltpu

HIDDEN_SIZE = 128
INPUT_SIZE = 28
NUM_CLASSES = 10
NUM_LAYERS = 1          # single layer only (matches module constant)

TIME_CHUNK = 128        # max time steps handled per grid step
MAX_CHUNK_ROWS = 8192   # cap chunk*B_pad so 2x double-buffered xw fits v7x VMEM
UNROLL = 16             # partial unroll of the in-kernel time loop
MXU_DTYPE = jnp.bfloat16  # recurrent-matmul operand dtype (f32 accumulate)


def _round_up(x, m):
    return ((x + m - 1) // m) * m


def rnn_chunk_kernel(xw_ref, whh_ref, wfc_ref, bfc_ref, out_ref, h_scratch,
                     *, chunk, num_full_chunks, rem_steps, unroll):
    """One grid step == one chunk of up to `chunk` time steps.

    xw_ref:    (chunk, B_pad, H) f32   precomputed x@W_ih^T + (b_ih + b_hh)
    whh_ref:   (H, H)  mxu_dtype       W_hh^T -- the stationary MXU RHS
    wfc_ref:   (H, C_pad) f32          fc weight, transposed, lane-padded
    bfc_ref:   (1, C_pad) f32          fc bias, lane-padded
    out_ref:   (B_pad, C_pad) f32      logits (written on the last chunk only)
    h_scratch: (B_pad, H) f32          hidden state carried across chunks
    """
    c = pl.program_id(0)

    @pl.when(c == 0)
    def _():
        h_scratch[...] = jnp.zeros_like(h_scratch)

    # W_hh^T stays the stationary MXU RHS across the whole unrolled loop; h
    # streams as the tiny (B_pad, H) LHS.  Do NOT flip this orientation -- it
    # would force an RHS reload every time step.
    # TODO(synk): pltpu.matmul_push_rhs/acc_lhs/pop would *guarantee* a single
    # RHS push per chunk; rely on Mosaic hoisting the constant RHS for now.
    whh = whh_ref[...]
    mxu_dtype = whh.dtype

    def step(t, h):
        # h_t = tanh(xw_t + h_{t-1} @ W_hh^T); biases already folded into xw.
        # bf16 operands on the MXU, f32 accumulate; add + tanh kept in f32
        # (keeps v5e's f32-only VPU/EUP path and preserves accuracy off MXU).
        return jnp.tanh(
            xw_ref[t]
            + jnp.dot(h.astype(mxu_dtype), whh,
                      preferred_element_type=jnp.float32))

    # Full chunks: clean, unmasked, partially-unrolled loop (hot path).
    if num_full_chunks > 0:
        @pl.when(c < num_full_chunks)
        def _():
            h_scratch[...] = jax.lax.fori_loop(
                0, chunk, step, h_scratch[...], unroll=unroll)

    # Ragged final chunk (only if T % chunk != 0): run exactly rem_steps real
    # steps -- no per-step tail mask, no wasted matmuls on padded steps.
    if rem_steps > 0:
        @pl.when(c == num_full_chunks)
        def _():
            h_scratch[...] = jax.lax.fori_loop(
                0, rem_steps, step, h_scratch[...],
                unroll=min(unroll, rem_steps))

    # Final Linear on the last hidden state only (weights loaded once).
    @pl.when(c == pl.num_programs(0) - 1)
    def _():
        h = h_scratch[...]
        out_ref[...] = (
            jnp.dot(h, wfc_ref[...], preferred_element_type=jnp.float32)
            + bfc_ref[...]).astype(out_ref.dtype)


def prepare_params(w_ih, w_hh, b_ih, b_hh, w_fc, b_fc, *, mxu_dtype=MXU_DTYPE):
    """One-time weight prep (transpose / pad / cast), hoisted off the per-call path."""
    H = w_ih.shape[0]
    C = w_fc.shape[0]
    C_pad = _round_up(C, 128)
    params = dict(
        w_ih=w_ih.astype(jnp.float32),                            # (H, I)
        bias=(b_ih + b_hh).astype(jnp.float32),                   # (H,) folded biases
        whh_t=jnp.transpose(w_hh).astype(mxu_dtype),              # (H, H) MXU RHS
        wfc_t=jnp.zeros((H, C_pad), jnp.float32).at[:, :C].set(
            jnp.transpose(w_fc).astype(jnp.float32)),             # (H, C_pad)
        bfc_p=jnp.zeros((1, C_pad), jnp.float32).at[0, :C].set(
            b_fc.astype(jnp.float32)),                            # (1, C_pad)
    )
    return params, C


@functools.partial(jax.jit, static_argnames=("num_classes", "time_chunk"))
def rnn_forward(x, params, *, num_classes, time_chunk=TIME_CHUNK):
    """x: (B, T, I) batch_first float32. Returns logits (B, num_classes)."""
    w_ih, bias = params["w_ih"], params["bias"]
    whh_t, wfc_t, bfc_p = params["whh_t"], params["wfc_t"], params["bfc_p"]

    B, T, I = x.shape
    H = w_ih.shape[0]
    C_pad = wfc_t.shape[1]
    B_pad = max(8, _round_up(B, 8))        # fill sublanes

    # ---- Input projection hoisted out of the recurrence: one big MXU-friendly
    # matmul, emitted directly in time-major (T, B_pad, H) order, biases folded.
    # TODO(synk): fuse into the kernel for long T / large B to avoid the xw HBM
    # round-trip (xw is ~H/I = 4.6x larger than x).
    x_pad = jnp.pad(x.astype(jnp.float32), ((0, B_pad - B), (0, 0), (0, 0)))
    xw = jnp.einsum('bti,hi->tbh', x_pad, w_ih,
                    preferred_element_type=jnp.float32)
    xw = xw + bias[None, None, :]

    # ---- Time-chunking.  Cap chunk*B_pad so the double-buffered xw chunk
    # (2 * chunk * B_pad * H * 4 B) fits v7x's 64 MiB VMEM (32 MiB scoped).
    chunk = max(1, min(time_chunk, T, MAX_CHUNK_ROWS // B_pad))
    num_chunks = pl.cdiv(T, chunk)
    num_full_chunks = T // chunk
    rem_steps = T - num_full_chunks * chunk
    T_pad = num_chunks * chunk
    if T_pad != T:
        xw = jnp.pad(xw, ((0, T_pad - T), (0, 0), (0, 0)))

    kernel = functools.partial(
        rnn_chunk_kernel,
        chunk=chunk, num_full_chunks=num_full_chunks, rem_steps=rem_steps,
        unroll=min(chunk, UNROLL))

    grid_spec = pltpu.PrefetchScalarGridSpec(
        num_scalar_prefetch=0,
        grid=(num_chunks,),
        in_specs=[
            pl.BlockSpec((chunk, B_pad, H), lambda c: (c, 0, 0)),  # xw chunk
            pl.BlockSpec((H, H), lambda c: (0, 0)),                # W_hh^T (bf16)
            pl.BlockSpec((H, C_pad), lambda c: (0, 0)),            # W_fc^T
            pl.BlockSpec((1, C_pad), lambda c: (0, 0)),            # b_fc
        ],
        out_specs=pl.BlockSpec((B_pad, C_pad), lambda c: (0, 0)),
        scratch_shapes=[pltpu.VMEM((B_pad, H), jnp.float32)],
    )

    out_pad = pl.pallas_call(
        kernel,
        out_shape=jax.ShapeDtypeStruct((B_pad, C_pad), jnp.float32),
        grid_spec=grid_spec,
        compiler_params=pltpu.CompilerParams(
            # Serial time recurrence.
            # TODO(synk): for large batches add a leading "parallel" batch-block
            # axis (per-block h_scratch) to use v7x's second TensorCore.
            dimension_semantics=("arbitrary",),
        ),
    )(xw, whh_t, wfc_t, bfc_p)

    return out_pad[:B, :num_classes]


def reference_forward(x, w_ih, w_hh, b_ih, b_hh, w_fc, b_fc, mxu_dtype=None):
    """Pure-JAX reference matching torch semantics.  If mxu_dtype is given, the
    recurrent matmul operands are cast the same way the kernel does."""
    B, T, I = x.shape
    H = w_ih.shape[0]
    xw = jnp.einsum('bti,hi->tbh', x.astype(jnp.float32),
                    w_ih.astype(jnp.float32)) + (b_ih + b_hh)[None, None, :]
    whh_t = jnp.transpose(w_hh).astype(jnp.float32)
    whh_mm = whh_t if mxu_dtype is None else whh_t.astype(mxu_dtype)

    def step(h, xw_t):
        lhs = h if mxu_dtype is None else h.astype(mxu_dtype)
        h = jnp.tanh(xw_t + jnp.dot(lhs, whh_mm,
                                    preferred_element_type=jnp.float32))
        return h, None

    h0 = jnp.zeros((B, H), jnp.float32)
    h_last, _ = jax.lax.scan(step, h0, xw)
    return h_last @ jnp.transpose(w_fc).astype(jnp.float32) + b_fc


if __name__ == "__main__":
    B, T = 2, 8
    H, I, C = HIDDEN_SIZE, INPUT_SIZE, NUM_CLASSES

    key = jax.random.PRNGKey(0)
    kx, k1, k2, k3, k4, k5, k6 = jax.random.split(key, 7)

    # deterministic "PyTorch-like" init: uniform(-1/sqrt(H), 1/sqrt(H))
    s = 1.0 / jnp.sqrt(jnp.float32(H))
    x = jax.random.normal(kx, (B, T, I), jnp.float32)
    w_ih = jax.random.uniform(k1, (H, I), jnp.float32, -s, s)
    w_hh = jax.random.uniform(k2, (H, H), jnp.float32, -s, s)
    b_ih = jax.random.uniform(k3, (H,), jnp.float32, -s, s)
    b_hh = jax.random.uniform(k4, (H,), jnp.float32, -s, s)
    w_fc = jax.random.uniform(k5, (C, H), jnp.float32, -s, s)
    b_fc = jax.random.uniform(k6, (C,), jnp.float32, -s, s)

    params, num_classes = prepare_params(w_ih, w_hh, b_ih, b_hh, w_fc, b_fc,
                                         mxu_dtype=MXU_DTYPE)
    out = rnn_forward(x, params, num_classes=num_classes)
    out = jax.block_until_ready(out)
    assert out.shape == (B, C)

    # Tight check vs a reference with matched bf16 recurrence operands.
    ref_matched = reference_forward(x, w_ih, w_hh, b_ih, b_hh, w_fc, b_fc,
                                    mxu_dtype=MXU_DTYPE)
    err_m = float(jnp.max(jnp.abs(out - ref_matched)))
    assert jnp.allclose(out, ref_matched, atol=2e-3, rtol=2e-3), err_m

    # Sanity check vs the exact f32 / torch-semantics reference (bf16 MXU
    # operands cost a few 1e-3 at the logits over T=8 recurrent steps).
    ref_f32 = reference_forward(x, w_ih, w_hh, b_ih, b_hh, w_fc, b_fc)
    err_f = float(jnp.max(jnp.abs(out - ref_f32)))
    assert jnp.allclose(out, ref_f32, atol=5e-2, rtol=0.0), err_f

    print("KERNEL_OK")
</pallas_src>

<mosaic_0001>
module attributes {stable_mosaic.version = 11 : i64} {
  func.func @rnn_chunk_kernel(%arg0: i32, %arg1: memref<8x8x128xf32, #tpu.memory_space<vmem>>, %arg2: memref<128x128xbf16, #tpu.memory_space<vmem>>, %arg3: memref<128x128xf32, #tpu.memory_space<vmem>>, %arg4: memref<1x128xf32, #tpu.memory_space<vmem>>, %arg5: memref<8x128xf32, #tpu.memory_space<vmem>>, %arg6: memref<8x128xf32, #tpu.memory_space<vmem>>) attributes {dimension_semantics = [#tpu.dimension_semantics<arbitrary>], iteration_bounds = array<i64: 1>, scalar_prefetch = 0 : i64, scratch_operands = 1 : i64, tpu.core_type = #tpu.core_type<tc>, window_params = [{transform_indices = @transform_0, window_bounds = array<i64: 8, 8, 128>}, {pipeline_mode = #tpu.pipeline_mode<synchronous>, transform_indices = @transform_1, window_bounds = array<i64: 128, 128>}, {pipeline_mode = #tpu.pipeline_mode<synchronous>, transform_indices = @transform_2, window_bounds = array<i64: 128, 128>}, {pipeline_mode = #tpu.pipeline_mode<synchronous>, transform_indices = @transform_3, window_bounds = array<i64: 1, 128>}, {pipeline_mode = #tpu.pipeline_mode<synchronous>, transform_indices = @transform_4, window_bounds = array<i64: 8, 128>}]} {
    %c0_i32 = arith.constant 0 : i32
    %0 = arith.cmpi eq, %arg0, %c0_i32 : i32
    %1 = arith.extui %0 : i1 to i32
    %c0_i32_0 = arith.constant 0 : i32
    %2 = arith.cmpi ne, %1, %c0_i32_0 : i32
    scf.if %2 {
      %cst = arith.constant 0.000000e+00 : f32
      %10 = vector.broadcast %cst : f32 to vector<8x128xf32>
      %c0_5 = arith.constant 0 : index
      %c0_6 = arith.constant 0 : index
      %11 = vector.load %arg6[%c0_5, %c0_6] : memref<8x128xf32, #tpu.memory_space<vmem>>, vector<8x128xf32>
      tpu.vector_store %arg6[%c0_5, %c0_6], %10 {strides = array<i32>} : memref<8x128xf32, #tpu.memory_space<vmem>>, vector<8x128xf32>,
    } else {
    }
    %c0 = arith.constant 0 : index
    %c0_1 = arith.constant 0 : index
    %3 = vector.load %arg2[%c0, %c0_1] : memref<128x128xbf16, #tpu.memory_space<vmem>>, vector<128x128xbf16>
    %c1_i32 = arith.constant 1 : i32
    %4 = arith.cmpi slt, %arg0, %c1_i32 : i32
    %5 = arith.extui %4 : i1 to i32
    %c0_i32_2 = arith.constant 0 : i32
    %6 = arith.cmpi ne, %5, %c0_i32_2 : i32
    scf.if %6 {
      %c0_5 = arith.constant 0 : index
      %c0_6 = arith.constant 0 : index
      %10 = vector.load %arg6[%c0_5, %c0_6] : memref<8x128xf32, #tpu.memory_space<vmem>>, vector<8x128xf32>
      %c0_i32_7 = arith.constant 0 : i32
      %11 = arith.index_cast %c0_i32_7 : i32 to index
      %c0_8 = arith.constant 0 : index
      %c0_9 = arith.constant 0 : index
      %12 = vector.load %arg1[%11, %c0_8, %c0_9] : memref<8x8x128xf32, #tpu.memory_space<vmem>>, vector<1x8x128xf32>
      %13 = vector.shape_cast %12 : vector<1x8x128xf32> to vector<8x128xf32>
      %14 = arith.truncf %10 : vector<8x128xf32> to vector<8x128xbf16>
      %cst = arith.constant dense<0.000000e+00> : vector<8x128xf32>
      %15 = tpu.matmul %14, %3, %cst {dimension_numbers = #tpu.dot_dimension_numbers<[1], [0], [0], [1], [0, 0, 1, 1], [], []>} : vector<8x128xbf16>, vector<128x128xbf16>, vector<8x128xf32> -> vector<8x128xf32>
      %16 = arith.addf %13, %15 : vector<8x128xf32>
      %17 = math.tanh %16 : vector<8x128xf32>
      %c1_i32_10 = arith.constant 1 : i32
      %18 = arith.index_cast %c1_i32_10 : i32 to index
      %c0_11 = arith.constant 0 : index
      %c0_12 = arith.constant 0 : index
      %19 = vector.load %arg1[%18, %c0_11, %c0_12] : memref<8x8x128xf32, #tpu.memory_space<vmem>>, vector<1x8x128xf32>
      %20 = vector.shape_cast %19 : vector<1x8x128xf32> to vector<8x128xf32>
      %21 = arith.truncf %17 : vector<8x128xf32> to vector<8x128xbf16>
      %cst_13 = arith.constant dense<0.000000e+00> : vector<8x128xf32>
      %22 = tpu.matmul %21, %3, %cst_13 {dimension_numbers = #tpu.dot_dimension_numbers<[1], [0], [0], [1], [0, 0, 1, 1], [], []>} : vector<8x128xbf16>, vector<128x128xbf16>, vector<8x128xf32> -> vector<8x128xf32>
      %23 = arith.addf %20, %22 : vector<8x128xf32>
      %24 = math.tanh %23 : vector<8x128xf32>
      %c2_i32 = arith.constant 2 : i32
      %25 = arith.index_cast %c2_i32 : i32 to index
      %c0_14 = arith.constant 0 : index
      %c0_15 = arith.constant 0 : index
      %26 = vector.load %arg1[%25, %c0_14, %c0_15] : memref<8x8x128xf32, #tpu.memory_space<vmem>>, vector<1x8x128xf32>
      %27 = vector.shape_cast %26 : vector<1x8x128xf32> to vector<8x128xf32>
      %28 = arith.truncf %24 : vector<8x128xf32> to vector<8x128xbf16>
      %cst_16 = arith.constant dense<0.000000e+00> : vector<8x128xf32>
      %29 = tpu.matmul %28, %3, %cst_16 {dimension_numbers = #tpu.dot_dimension_numbers<[1], [0], [0], [1], [0, 0, 1, 1], [], []>} : vector<8x128xbf16>, vector<128x128xbf16>, vector<8x128xf32> -> vector<8x128xf32>
      %30 = arith.addf %27, %29 : vector<8x128xf32>
      %31 = math.tanh %30 : vector<8x128xf32>
      %c3_i32 = arith.constant 3 : i32
      %32 = arith.index_cast %c3_i32 : i32 to index
      %c0_17 = arith.constant 0 : index
      %c0_18 = arith.constant 0 : index
      %33 = vector.load %arg1[%32, %c0_17, %c0_18] : memref<8x8x128xf32, #tpu.memory_space<vmem>>, vector<1x8x128xf32>
      %34 = vector.shape_cast %33 : vector<1x8x128xf32> to vector<8x128xf32>
      %35 = arith.truncf %31 : vector<8x128xf32> to vector<8x128xbf16>
      %cst_19 = arith.constant dense<0.000000e+00> : vector<8x128xf32>
      %36 = tpu.matmul %35, %3, %cst_19 {dimension_numbers = #tpu.dot_dimension_numbers<[1], [0], [0], [1], [0, 0, 1, 1], [], []>} : vector<8x128xbf16>, vector<128x128xbf16>, vector<8x128xf32> -> vector<8x128xf32>
      %37 = arith.addf %34, %36 : vector<8x128xf32>
      %38 = math.tanh %37 : vector<8x128xf32>
      %c4_i32 = arith.constant 4 : i32
      %39 = arith.index_cast %c4_i32 : i32 to index
      %c0_20 = arith.constant 0 : index
      %c0_21 = arith.constant 0 : index
      %40 = vector.load %arg1[%39, %c0_20, %c0_21] : memref<8x8x128xf32, #tpu.memory_space<vmem>>, vector<1x8x128xf32>
      %41 = vector.shape_cast %40 : vector<1x8x128xf32> to vector<8x128xf32>
      %42 = arith.truncf %38 : vector<8x128xf32> to vector<8x128xbf16>
      %cst_22 = arith.constant dense<0.000000e+00> : vector<8x128xf32>
      %43 = tpu.matmul %42, %3, %cst_22 {dimension_numbers = #tpu.dot_dimension_numbers<[1], [0], [0], [1], [0, 0, 1, 1], [], []>} : vector<8x128xbf16>, vector<128x128xbf16>, vector<8x128xf32> -> vector<8x128xf32>
      %44 = arith.addf %41, %43 : vector<8x128xf32>
      %45 = math.tanh %44 : vector<8x128xf32>
      %c5_i32 = arith.constant 5 : i32
      %46 = arith.index_cast %c5_i32 : i32 to index
      %c0_23 = arith.constant 0 : index
      %c0_24 = arith.constant 0 : index
      %47 = vector.load %arg1[%46, %c0_23, %c0_24] : memref<8x8x128xf32, #tpu.memory_space<vmem>>, vector<1x8x128xf32>
      %48 = vector.shape_cast %47 : vector<1x8x128xf32> to vector<8x128xf32>
      %49 = arith.truncf %45 : vector<8x128xf32> to vector<8x128xbf16>
      %cst_25 = arith.constant dense<0.000000e+00> : vector<8x128xf32>
      %50 = tpu.matmul %49, %3, %cst_25 {dimension_numbers = #tpu.dot_dimension_numbers<[1], [0], [0], [1], [0, 0, 1, 1], [], []>} : vector<8x128xbf16>, vector<128x128xbf16>, vector<8x128xf32> -> vector<8x128xf32>
      %51 = arith.addf %48, %50 : vector<8x128xf32>
      %52 = math.tanh %51 : vector<8x128xf32>
      %c6_i32 = arith.constant 6 : i32
      %53 = arith.index_cast %c6_i32 : i32 to index
      %c0_26 = arith.constant 0 : index
      %c0_27 = arith.constant 0 : index
      %54 = vector.load %arg1[%53, %c0_26, %c0_27] : memref<8x8x128xf32, #tpu.memory_space<vmem>>, vector<1x8x128xf32>
      %55 = vector.shape_cast %54 : vector<1x8x128xf32> to vector<8x128xf32>
      %56 = arith.truncf %52 : vector<8x128xf32> to vector<8x128xbf16>
      %cst_28 = arith.constant dense<0.000000e+00> : vector<8x128xf32>
      %57 = tpu.matmul %56, %3, %cst_28 {dimension_numbers = #tpu.dot_dimension_numbers<[1], [0], [0], [1], [0, 0, 1, 1], [], []>} : vector<8x128xbf16>, vector<128x128xbf16>, vector<8x128xf32> -> vector<8x128xf32>
      %58 = arith.addf %55, %57 : vector<8x128xf32>
      %59 = math.tanh %58 : vector<8x128xf32>
      %c7_i32 = arith.constant 7 : i32
      %60 = arith.index_cast %c7_i32 : i32 to index
      %c0_29 = arith.constant 0 : index
      %c0_30 = arith.constant 0 : index
      %61 = vector.load %arg1[%60, %c0_29, %c0_30] : memref<8x8x128xf32, #tpu.memory_space<vmem>>, vector<1x8x128xf32>
      %62 = vector.shape_cast %61 : vector<1x8x128xf32> to vector<8x128xf32>
      %63 = arith.truncf %59 : vector<8x128xf32> to vector<8x128xbf16>
      %cst_31 = arith.constant dense<0.000000e+00> : vector<8x128xf32>
      %64 = tpu.matmul %63, %3, %cst_31 {dimension_numbers = #tpu.dot_dimension_numbers<[1], [0], [0], [1], [0, 0, 1, 1], [], []>} : vector<8x128xbf16>, vector<128x128xbf16>, vector<8x128xf32> -> vector<8x128xf32>
      %65 = arith.addf %62, %64 : vector<8x128xf32>
      %66 = math.tanh %65 : vector<8x128xf32>
      %c8_i32 = arith.constant 8 : i32
      %c0_32 = arith.constant 0 : index
      %c0_33 = arith.constant 0 : index
      %67 = vector.load %arg6[%c0_32, %c0_33] : memref<8x128xf32, #tpu.memory_space<vmem>>, vector<8x128xf32>
      tpu.vector_store %arg6[%c0_32, %c0_33], %66 {strides = array<i32>} : memref<8x128xf32, #tpu.memory_space<vmem>>, vector<8x128xf32>,
    } else {
    }
    %c0_i32_3 = arith.constant 0 : i32
    %7 = arith.cmpi eq, %arg0, %c0_i32_3 : i32
    %8 = arith.extui %7 : i1 to i32
    %c0_i32_4 = arith.constant 0 : i32
    %9 = arith.cmpi ne, %8, %c0_i32_4 : i32
    scf.if %9 {
      %c0_5 = arith.constant 0 : index
      %c0_6 = arith.constant 0 : index
      %10 = vector.load %arg6[%c0_5, %c0_6] : memref<8x128xf32, #tpu.memory_space<vmem>>, vector<8x128xf32>
      %c0_7 = arith.constant 0 : index
      %c0_8 = arith.constant 0 : index
      %11 = vector.load %arg3[%c0_7, %c0_8] : memref<128x128xf32, #tpu.memory_space<vmem>>, vector<128x128xf32>
      %cst = arith.constant dense<0.000000e+00> : vector<8x128xf32>
      %12 = tpu.matmul %10, %11, %cst {dimension_numbers = #tpu.dot_dimension_numbers<[1], [0], [0], [1], [0, 0, 1, 1], [], []>} : vector<8x128xf32>, vector<128x128xf32>, vector<8x128xf32> -> vector<8x128xf32>
      %c0_9 = arith.constant 0 : index
      %c0_10 = arith.constant 0 : index
      %13 = vector.load %arg4[%c0_9, %c0_10] : memref<1x128xf32, #tpu.memory_space<vmem>>, vector<1x128xf32>
      %14 = vector.broadcast %13 : vector<1x128xf32> to vector<8x128xf32>
      %15 = arith.addf %12, %14 : vector<8x128xf32>
      %c0_11 = arith.constant 0 : index
      %c0_12 = arith.constant 0 : index
      %16 = vector.load %arg5[%c0_11, %c0_12] : memref<8x128xf32, #tpu.memory_space<vmem>>, vector<8x128xf32>
      tpu.vector_store %arg5[%c0_11, %c0_12], %15 {strides = array<i32>} : memref<8x128xf32, #tpu.memory_space<vmem>>, vector<8x128xf32>,
    } else {
    }
    return
  }
  func.func @transform_0(%arg0: i32) -> (i32, i32, i32) {
    %c0_i32 = arith.constant 0 : i32
    %c0_i32_0 = arith.constant 0 : i32
    %c0_i32_1 = arith.constant 0 : i32
    return %arg0, %c0_i32, %c0_i32_0 : i32, i32, i32
  }
  func.func @transform_1(%arg0: i32) -> (i32, i32) {
    %c0_i32 = arith.constant 0 : i32
    %c0_i32_0 = arith.constant 0 : i32
    %c0_i32_1 = arith.constant 0 : i32
    return %c0_i32, %c0_i32_0 : i32, i32
  }
  func.func @transform_2(%arg0: i32) -> (i32, i32) {
    %c0_i32 = arith.constant 0 : i32
    %c0_i32_0 = arith.constant 0 : i32
    %c0_i32_1 = arith.constant 0 : i32
    return %c0_i32, %c0_i32_0 : i32, i32
  }
  func.func @transform_3(%arg0: i32) -> (i32, i32) {
    %c0_i32 = arith.constant 0 : i32
    %c0_i32_0 = arith.constant 0 : i32
    %c0_i32_1 = arith.constant 0 : i32
    return %c0_i32, %c0_i32_0 : i32, i32
  }
  func.func @transform_4(%arg0: i32) -> (i32, i32) {
    %c0_i32 = arith.constant 0 : i32
    %c0_i32_0 = arith.constant 0 : i32
    %c0_i32_1 = arith.constant 0 : i32
    return %c0_i32, %c0_i32_0 : i32, i32
  }
}

</mosaic_0001>

<llo_original>
// kernel: rnn_forward.1
$region0: #{rnn_forward.1}
  #allocation0 [shape = 'u32[]', space=smem, size = 0x4, offset = 0x4, fixed_abs, tag = 'smem constant byte address 0x4 - core index']
  #allocation1 [shape = 'u32[144,128]{1,0:T(1,128)}', space=vmem, size = 0x12000, scoped, tag = 'internal scratch']
  #allocation2 [shape = 'f32[8,128]{1,0:T(8,128)}', space=vmem, size = 0x1000, scoped, tag = 'scratch operand']
  %s0 = inlined_call_operand.vmem [shape: f32[8,8,128], index: 0, kind: input, shape index: {}]
  %s1 = inlined_call_operand.hbm [shape: bf16[128,128], index: 1, kind: input, shape index: {}]
  %s2 = inlined_call_operand.vmem [shape: f32[128,128], index: 2, kind: input, shape index: {}]
  %s3 = inlined_call_operand.vmem [shape: f32[1,128], index: 3, kind: input, shape index: {}]
  %s4 = inlined_call_operand.vmem [shape: f32[8,128], index: 4, kind: output, shape index: {}]
  %s5 = sld [smem:[#allocation0]]
  $region42: #{rnn_forward.1} parent=0
    _
  %s7 = ssub.s32 1, %s5
  %s8 = scalar_select 0, %s7, %s5
  $region1: #{rnn_forward.1} parent=0
    #allocation3 [shape = 'u8[32768]{0}', space=vmem, size = 0x8000, scoped, tag = 'input window, operand 1, single buffered']
    #allocation4 [shape = 's32[1]{0}', space=sflag, size = 0x4, scoped, tag = 'scoped memory for rnn_forward.1']
    %9 = vsyncpa [#allocation4], 0
    // Predicated region
    $region2: #{rnn_forward.1} parent=1 // pred_check
      _
    $region3: #{rnn_forward.1} parent=1 // pred_check_branch
      %11 = sbr.rel (0) target = $region5
    $region4: #{rnn_forward.1} parent=1 // pred_region
      _
    $region5: #{rnn_forward.1} parent=1 // pred_fallthru
      _
    // Predicated region
    $region6: #{rnn_forward.1} parent=1 // pred_check
      _
    $region7: #{rnn_forward.1} parent=1 // pred_check_branch
      %13 = sbr.rel (0) target = $region9
    $region8: #{rnn_forward.1} parent=1 // pred_region
      %s15 = ssub.s32 1024, 1024
      %16 = vsyncadd [#allocation4], %s15
      %s17 = sshll.u32 [#allocation3], 4
      %s18 = int_to_ptr.vmem [resolvable:$true] %s17
      %23 = dma.hbm_to_vmem [thread:$0]  %s1, 1024, %s18, [#allocation4], 64, 64, 4
    $region9: #{rnn_forward.1} parent=1 // pred_fallthru
      _
    // Predicated region
    $region10: #{rnn_forward.1} parent=1 // pred_check
      _
    $region11: #{rnn_forward.1} parent=1 // pred_check_branch
      %25 = sbr.rel (0) target = $region13
    $region12: #{rnn_forward.1} parent=1 // pred_region
      _
    $region13: #{rnn_forward.1} parent=1 // pred_fallthru
      _
    // Predicated region
    $region14: #{rnn_forward.1} parent=1 // pred_check
      _
    $region15: #{rnn_forward.1} parent=1 // pred_check_branch
      %27 = sbr.rel (0) target = $region17
    $region16: #{rnn_forward.1} parent=1 // pred_region
      _
    $region17: #{rnn_forward.1} parent=1 // pred_fallthru
      _
    // Predicated region
    $region18: #{rnn_forward.1} parent=1 // pred_check
      _
    $region19: #{rnn_forward.1} parent=1 // pred_check_branch
      %29 = sbr.rel (0) target = $region21
    $region20: #{rnn_forward.1} parent=1 // pred_region
      %30 = dma.done [#allocation4], 1024
    $region21: #{rnn_forward.1} parent=1 // pred_fallthru
      _
    %p32 = scmp.eq.s32.totalorder 0, 0
    // Predicated region
    $region22: #{rnn_forward.1} parent=1 // pred_check
      %p33 = pneg %p32
    $region23: #{rnn_forward.1} parent=1 // pred_check_branch
      %35 = sbr.rel (%p33) target = $region25
    $region24: #{rnn_forward.1} parent=1 // pred_region
      %36 = vst [vmem:[#allocation2] sm:$0xff] 0.0
    $region25: #{rnn_forward.1} parent=1 // pred_fallthru
      _
    %v37 = vld [vmem:[#allocation3] sm:$0xf]
    %v38 = vld [vmem:[#allocation3 + $0x4] sm:$0xf]
    %v39 = vld [vmem:[#allocation3 + $0x8] sm:$0xf]
    %v40 = vld [vmem:[#allocation3 + $0xc] sm:$0xf]
    %v41 = vld [vmem:[#allocation3 + $0x10] sm:$0xf]
    %v42 = vld [vmem:[#allocation3 + $0x14] sm:$0xf]
    %v43 = vld [vmem:[#allocation3 + $0x18] sm:$0xf]
    %v44 = vld [vmem:[#allocation3 + $0x1c] sm:$0xf]
    %v45 = vld [vmem:[#allocation3 + $0x20] sm:$0xf]
    %v46 = vld [vmem:[#allocation3 + $0x24] sm:$0xf]
    %v47 = vld [vmem:[#allocation3 + $0x28] sm:$0xf]
    %v48 = vld [vmem:[#allocation3 + $0x2c] sm:$0xf]
    %v49 = vld [vmem:[#allocation3 + $0x30] sm:$0xf]
    %v50 = vld [vmem:[#allocation3 + $0x34] sm:$0xf]
    %v51 = vld [vmem:[#allocation3 + $0x38] sm:$0xf]
    %v52 = vld [vmem:[#allocation3 + $0x3c] sm:$0xf]
    %p53 = scmp.lt.s32.totalorder 0, 1
    // Predicated region
    $region26: #{rnn_forward.1} parent=1 // pred_check
      %p54 = pneg %p53
    $region27: #{rnn_forward.1} parent=1 // pred_check_branch
      %56 = sbr.rel (%p54) target = $region29
    $region28: #{rnn_forward.1} parent=1 // pred_region
      %v57 = vld [vmem:[#allocation2] sm:$0xff]
      %v58 = vld [vmem:[%s0] sm:$0xff]
      %v59 = vpack.c.bf16 %v57, %v57
      %v76 = vunpack.c.l.b16 %v37
      %v77 = vunpack.c.l.b16 %v38
      %v78 = vunpack.c.l.b16 %v39
      %v79 = vunpack.c.l.b16 %v40
      %v80 = vunpack.c.l.b16 %v41
      %v81 = vunpack.c.l.b16 %v42
      %v82 = vunpack.c.l.b16 %v43
      %v83 = vunpack.c.l.b16 %v44
      %v84 = vunpack.c.l.b16 %v45
      %v85 = vunpack.c.l.b16 %v46
      %v86 = vunpack.c.l.b16 %v47
      %v87 = vunpack.c.l.b16 %v48
      %v88 = vunpack.c.l.b16 %v49
      %v89 = vunpack.c.l.b16 %v50
      %v90 = vunpack.c.l.b16 %v51
      %v91 = vunpack.c.l.b16 %v52
      %v92 = vpack.c.b16 %v77, %v76
      %v93 = vpack.c.b16 %v79, %v78
      %v94 = vpack.c.b16 %v81, %v80
      %v95 = vpack.c.b16 %v83, %v82
      %v96 = vpack.c.b16 %v85, %v84
      %v97 = vpack.c.b16 %v87, %v86
      %v98 = vpack.c.b16 %v89, %v88
      %v99 = vpack.c.b16 %v91, %v90
      %108 = vmatprep.subr.bf16.mxu0 0
      %109 = vmatpush1.bf16.msra.mxu0 %v99
      %110 = vmatprep.subr.bf16.mxu0 0
      %111 = vmatpush1.bf16.msra.mxu0 %v98
      %112 = vmatprep.subr.bf16.mxu0 0
      %113 = vmatpush1.bf16.msra.mxu0 %v97
      %114 = vmatprep.subr.bf16.mxu0 0
      %115 = vmatpush1.bf16.msra.mxu0 %v96
      %116 = vmatprep.subr.bf16.mxu0 0
      %117 = vmatpush1.bf16.msra.mxu0 %v95
      %118 = vmatprep.subr.bf16.mxu0 0
      %119 = vmatpush1.bf16.msra.mxu0 %v94
      %120 = vmatprep.subr.bf16.mxu0 0
      %121 = vmatpush1.bf16.msra.mxu0 %v93
      %122 = vmatprep.subr.bf16.mxu0 0
      %123 = vmatpush1.bf16.msra.mxu0 %v92
      %124 = vmatprep.subr.bf16.mxu0 0
      %125 = vmatpush2.bf16.msra.mxu0 0
      %126 = vmatprep.subr.bf16.mxu0 0
      %127 = vmatpush2.bf16.msra.mxu0 0
      %128 = vmatprep.subr.bf16.mxu0 0
      %129 = vmatpush2.bf16.msra.mxu0 0
      %130 = vmatprep.subr.bf16.mxu0 0
      %131 = vmatpush2.bf16.msra.mxu0 0
      %132 = vmatprep.subr.bf16.mxu0 0
      %133 = vmatpush2.bf16.msra.mxu0 0
      %134 = vmatprep.subr.bf16.mxu0 0
      %135 = vmatpush2.bf16.msra.mxu0 0
      %136 = vmatprep.subr.bf16.mxu0 0
      %137 = vmatpush2.bf16.msra.mxu0 0
      %138 = vmatprep.subr.bf16.mxu0 0
      %139 = vmatpush2.bf16.msra.mxu0 0
      %140 = vmatprep.mubr.bf16.mxu0 0
      %141 = vmatmul.mubr.bf16.gmra.mxu0 %v59
      %v142 = vpop.f32.mrf.mxu0
      %v143 = vadd.f32 0.0, %v142
      %v144 = vpop.f32.mrf.mxu0
      %v145 = vpop.f32.mrf.mxu0
      %v146 = vpop.f32.mrf.mxu0
      %147 = vdwg.mxu0
      %v148 = vadd.f32 %v58, %v143
      %v149 = vtanh.pop %v148
      %s150 = scalar_lea.vmem %s0, 8
      %v151 = vld [vmem:[%s150] sm:$0xff]
      %v152 = vpack.c.bf16 %v149, %v149
      %153 = vmatprep.subr.bf16.mxu0 0
      %154 = vmatpush1.bf16.msra.mxu0 %v99
      %155 = vmatprep.subr.bf16.mxu0 0
      %156 = vmatpush1.bf16.msra.mxu0 %v98
      %157 = vmatprep.subr.bf16.mxu0 0
      %158 = vmatpush1.bf16.msra.mxu0 %v97
      %159 = vmatprep.subr.bf16.mxu0 0
      %160 = vmatpush1.bf16.msra.mxu0 %v96
      %161 = vmatprep.subr.bf16.mxu0 0
      %162 = vmatpush1.bf16.msra.mxu0 %v95
      %163 = vmatprep.subr.bf16.mxu0 0
      %164 = vmatpush1.bf16.msra.mxu0 %v94
      %165 = vmatprep.subr.bf16.mxu0 0
      %166 = vmatpush1.bf16.msra.mxu0 %v93
      %167 = vmatprep.subr.bf16.mxu0 0
      %168 = vmatpush1.bf16.msra.mxu0 %v92
      %169 = vmatprep.subr.bf16.mxu0 0
      %170 = vmatpush2.bf16.msra.mxu0 0
      %171 = vmatprep.subr.bf16.mxu0 0
      %172 = vmatpush2.bf16.msra.mxu0 0
      %173 = vmatprep.subr.bf16.mxu0 0
      %174 = vmatpush2.bf16.msra.mxu0 0
      %175 = vmatprep.subr.bf16.mxu0 0
      %176 = vmatpush2.bf16.msra.mxu0 0
      %177 = vmatprep.subr.bf16.mxu0 0
      %178 = vmatpush2.bf16.msra.mxu0 0
      %179 = vmatprep.subr.bf16.mxu0 0
      %180 = vmatpush2.bf16.msra.mxu0 0
      %181 = vmatprep.subr.bf16.mxu0 0
      %182 = vmatpush2.bf16.msra.mxu0 0
      %183 = vmatprep.subr.bf16.mxu0 0
      %184 = vmatpush2.bf16.msra.mxu0 0
      %185 = vmatprep.mubr.bf16.mxu0 0
      %186 = vmatmul.mubr.bf16.gmra.mxu0 %v152
      %v187 = vpop.f32.mrf.mxu0
      %v188 = vadd.f32 0.0, %v187
      %v189 = vpop.f32.mrf.mxu0
      %v190 = vpop.f32.mrf.mxu0
      %v191 = vpop.f32.mrf.mxu0
      %192 = vdwg.mxu0
      %v193 = vadd.f32 %v151, %v188
      %v194 = vtanh.pop %v193
      %s195 = scalar_lea.vmem %s0, 16
      %v196 = vld [vmem:[%s195] sm:$0xff]
      %v197 = vpack.c.bf16 %v194, %v194
      %198 = vmatprep.subr.bf16.mxu0 0
      %199 = vmatpush1.bf16.msra.mxu0 %v99
      %200 = vmatprep.subr.bf16.mxu0 0
      %201 = vmatpush1.bf16.msra.mxu0 %v98
      %202 = vmatprep.subr.bf16.mxu0 0
      %203 = vmatpush1.bf16.msra.mxu0 %v97
      %204 = vmatprep.subr.bf16.mxu0 0
      %205 = vmatpush1.bf16.msra.mxu0 %v96
      %206 = vmatprep.subr.bf16.mxu0 0
      %207 = vmatpush1.bf16.msra.mxu0 %v95
      %208 = vmatprep.subr.bf16.mxu0 0
      %209 = vmatpush1.bf16.msra.mxu0 %v94
      %210 = vmatprep.subr.bf16.mxu0 0
      %211 = vmatpush1.bf16.msra.mxu0 %v93
      %212 = vmatprep.subr.bf16.mxu0 0
      %213 = vmatpush1.bf16.msra.mxu0 %v92
      %214 = vmatprep.subr.bf16.mxu0 0
      %215 = vmatpush2.bf16.msra.mxu0 0
      %216 = vmatprep.subr.bf16.mxu0 0
      %217 = vmatpush2.bf16.msra.mxu0 0
      %218 = vmatprep.subr.bf16.mxu0 0
      %219 = vmatpush2.bf16.msra.mxu0 0
      %220 = vmatprep.subr.bf16.mxu0 0
      %221 = vmatpush2.bf16.msra.mxu0 0
      %222 = vmatprep.subr.bf16.mxu0 0
      %223 = vmatpush2.bf16.msra.mxu0 0
      %224 = vmatprep.subr.bf16.mxu0 0
      %225 = vmatpush2.bf16.msra.mxu0 0
      %226 = vmatprep.subr.bf16.mxu0 0
      %227 = vmatpush2.bf16.msra.mxu0 0
      %228 = vmatprep.subr.bf16.mxu0 0
      %229 = vmatpush2.bf16.msra.mxu0 0
      %230 = vmatprep.mubr.bf16.mxu0 0
      %231 = vmatmul.mubr.bf16.gmra.mxu0 %v197
      %v232 = vpop.f32.mrf.mxu0
      %v233 = vadd.f32 0.0, %v232
      %v234 = vpop.f32.mrf.mxu0
      %v235 = vpop.f32.mrf.mxu0
      %v236 = vpop.f32.mrf.mxu0
      %237 = vdwg.mxu0
      %v238 = vadd.f32 %v196, %v233
      %v239 = vtanh.pop %v238
      %s240 = scalar_lea.vmem %s0, 24
      %v241 = vld [vmem:[%s240] sm:$0xff]
      %v242 = vpack.c.bf16 %v239, %v239
      %243 = vmatprep.subr.bf16.mxu0 0
      %244 = vmatpush1.bf16.msra.mxu0 %v99
      %245 = vmatprep.subr.bf16.mxu0 0
      %246 = vmatpush1.bf16.msra.mxu0 %v98
      %247 = vmatprep.subr.bf16.mxu0 0
      %248 = vmatpush1.bf16.msra.mxu0 %v97
      %249 = vmatprep.subr.bf16.mxu0 0
      %250 = vmatpush1.bf16.msra.mxu0 %v96
      %251 = vmatprep.subr.bf16.mxu0 0
      %252 = vmatpush1.bf16.msra.mxu0 %v95
      %253 = vmatprep.subr.bf16.mxu0 0
      %254 = vmatpush1.bf16.msra.mxu0 %v94
      %255 = vmatprep.subr.bf16.mxu0 0
      %256 = vmatpush1.bf16.msra.mxu0 %v93
      %257 = vmatprep.subr.bf16.mxu0 0
      %258 = vmatpush1.bf16.msra.mxu0 %v92
      %259 = vmatprep.subr.bf16.mxu0 0
      %260 = vmatpush2.bf16.msra.mxu0 0
      %261 = vmatprep.subr.bf16.mxu0 0
      %262 = vmatpush2.bf16.msra.mxu0 0
      %263 = vmatprep.subr.bf16.mxu0 0
      %264 = vmatpush2.bf16.msra.mxu0 0
      %265 = vmatprep.subr.bf16.mxu0 0
      %266 = vmatpush2.bf16.msra.mxu0 0
      %267 = vmatprep.subr.bf16.mxu0 0
      %268 = vmatpush2.bf16.msra.mxu0 0
      %269 = vmatprep.subr.bf16.mxu0 0
      %270 = vmatpush2.bf16.msra.mxu0 0
      %271 = vmatprep.subr.bf16.mxu0 0
      %272 = vmatpush2.bf16.msra.mxu0 0
      %273 = vmatprep.subr.bf16.mxu0 0
      %274 = vmatpush2.bf16.msra.mxu0 0
      %275 = vmatprep.mubr.bf16.mxu0 0
      %276 = vmatmul.mubr.bf16.gmra.mxu0 %v242
      %v277 = vpop.f32.mrf.mxu0
      %v278 = vadd.f32 0.0, %v277
      %v279 = vpop.f32.mrf.mxu0
      %v280 = vpop.f32.mrf.mxu0
      %v281 = vpop.f32.mrf.mxu0
      %282 = vdwg.mxu0
      %v283 = vadd.f32 %v241, %v278
      %v284 = vtanh.pop %v283
      %s285 = scalar_lea.vmem %s0, 32
      %v286 = vld [vmem:[%s285] sm:$0xff]
      %v287 = vpack.c.bf16 %v284, %v284
      %288 = vmatprep.subr.bf16.mxu0 0
      %289 = vmatpush1.bf16.msra.mxu0 %v99
      %290 = vmatprep.subr.bf16.mxu0 0
      %291 = vmatpush1.bf16.msra.mxu0 %v98
      %292 = vmatprep.subr.bf16.mxu0 0
      %293 = vmatpush1.bf16.msra.mxu0 %v97
      %294 = vmatprep.subr.bf16.mxu0 0
      %295 = vmatpush1.bf16.msra.mxu0 %v96
      %296 = vmatprep.subr.bf16.mxu0 0
      %297 = vmatpush1.bf16.msra.mxu0 %v95
      %298 = vmatprep.subr.bf16.mxu0 0
      %299 = vmatpush1.bf16.msra.mxu0 %v94
      %300 = vmatprep.subr.bf16.mxu0 0
      %301 = vmatpush1.bf16.msra.mxu0 %v93
      %302 = vmatprep.subr.bf16.mxu0 0
      %303 = vmatpush1.bf16.msra.mxu0 %v92
      %304 = vmatprep.subr.bf16.mxu0 0
      %305 = vmatpush2.bf16.msra.mxu0 0
      %306 = vmatprep.subr.bf16.mxu0 0
      %307 = vmatpush2.bf16.msra.mxu0 0
      %308 = vmatprep.subr.bf16.mxu0 0
      %309 = vmatpush2.bf16.msra.mxu0 0
      %310 = vmatprep.subr.bf16.mxu0 0
      %311 = vmatpush2.bf16.msra.mxu0 0
      %312 = vmatprep.subr.bf16.mxu0 0
      %313 = vmatpush2.bf16.msra.mxu0 0
      %314 = vmatprep.subr.bf16.mxu0 0
      %315 = vmatpush2.bf16.msra.mxu0 0
      %316 = vmatprep.subr.bf16.mxu0 0
      %317 = vmatpush2.bf16.msra.mxu0 0
      %318 = vmatprep.subr.bf16.mxu0 0
      %319 = vmatpush2.bf16.msra.mxu0 0
      %320 = vmatprep.mubr.bf16.mxu0 0
      %321 = vmatmul.mubr.bf16.gmra.mxu0 %v287
      %v322 = vpop.f32.mrf.mxu0
      %v323 = vadd.f32 0.0, %v322
      %v324 = vpop.f32.mrf.mxu0
      %v325 = vpop.f32.mrf.mxu0
      %v326 = vpop.f32.mrf.mxu0
      %327 = vdwg.mxu0
      %v328 = vadd.f32 %v286, %v323
      %v329 = vtanh.pop %v328
      %s330 = scalar_lea.vmem %s0, 40
      %v331 = vld [vmem:[%s330] sm:$0xff]
      %v332 = vpack.c.bf16 %v329, %v329
      %333 = vmatprep.subr.bf16.mxu0 0
      %334 = vmatpush1.bf16.msra.mxu0 %v99
      %335 = vmatprep.subr.bf16.mxu0 0
      %336 = vmatpush1.bf16.msra.mxu0 %v98
      %337 = vmatprep.subr.bf16.mxu0 0
      %338 = vmatpush1.bf16.msra.mxu0 %v97
      %339 = vmatprep.subr.bf16.mxu0 0
      %340 = vmatpush1.bf16.msra.mxu0 %v96
      %341 = vmatprep.subr.bf16.mxu0 0
      %342 = vmatpush1.bf16.msra.mxu0 %v95
      %343 = vmatprep.subr.bf16.mxu0 0
      %344 = vmatpush1.bf16.msra.mxu0 %v94
      %345 = vmatprep.subr.bf16.mxu0 0
      %346 = vmatpush1.bf16.msra.mxu0 %v93
      %347 = vmatprep.subr.bf16.mxu0 0
      %348 = vmatpush1.bf16.msra.mxu0 %v92
      %349 = vmatprep.subr.bf16.mxu0 0
      %350 = vmatpush2.bf16.msra.mxu0 0
      %351 = vmatprep.subr.bf16.mxu0 0
      %352 = vmatpush2.bf16.msra.mxu0 0
      %353 = vmatprep.subr.bf16.mxu0 0
      %354 = vmatpush2.bf16.msra.mxu0 0
      %355 = vmatprep.subr.bf16.mxu0 0
      %356 = vmatpush2.bf16.msra.mxu0 0
      %357 = vmatprep.subr.bf16.mxu0 0
      %358 = vmatpush2.bf16.msra.mxu0 0
      %359 = vmatprep.subr.bf16.mxu0 0
      %360 = vmatpush2.bf16.msra.mxu0 0
      %361 = vmatprep.subr.bf16.mxu0 0
      %362 = vmatpush2.bf16.msra.mxu0 0
      %363 = vmatprep.subr.bf16.mxu0 0
      %364 = vmatpush2.bf16.msra.mxu0 0
      %365 = vmatprep.mubr.bf16.mxu0 0
      %366 = vmatmul.mubr.bf16.gmra.mxu0 %v332
      %v367 = vpop.f32.mrf.mxu0
      %v368 = vadd.f32 0.0, %v367
      %v369 = vpop.f32.mrf.mxu0
      %v370 = vpop.f32.mrf.mxu0
      %v371 = vpop.f32.mrf.mxu0
      %372 = vdwg.mxu0
      %v373 = vadd.f32 %v331, %v368
      %v374 = vtanh.pop %v373
      %s375 = scalar_lea.vmem %s0, 48
      %v376 = vld [vmem:[%s375] sm:$0xff]
      %v377 = vpack.c.bf16 %v374, %v374
      %378 = vmatprep.subr.bf16.mxu0 0
      %379 = vmatpush1.bf16.msra.mxu0 %v99
      %380 = vmatprep.subr.bf16.mxu0 0
      %381 = vmatpush1.bf16.msra.mxu0 %v98
      %382 = vmatprep.subr.bf16.mxu0 0
      %383 = vmatpush1.bf16.msra.mxu0 %v97
      %384 = vmatprep.subr.bf16.mxu0 0
      %385 = vmatpush1.bf16.msra.mxu0 %v96
      %386 = vmatprep.subr.bf16.mxu0 0
      %387 = vmatpush1.bf16.msra.mxu0 %v95
      %388 = vmatprep.subr.bf16.mxu0 0
      %389 = vmatpush1.bf16.msra.mxu0 %v94
      %390 = vmatprep.subr.bf16.mxu0 0
      %391 = vmatpush1.bf16.msra.mxu0 %v93
      %392 = vmatprep.subr.bf16.mxu0 0
      %393 = vmatpush1.bf16.msra.mxu0 %v92
      %394 = vmatprep.subr.bf16.mxu0 0
      %395 = vmatpush2.bf16.msra.mxu0 0
      %396 = vmatprep.subr.bf16.mxu0 0
      %397 = vmatpush2.bf16.msra.mxu0 0
      %398 = vmatprep.subr.bf16.mxu0 0
      %399 = vmatpush2.bf16.msra.mxu0 0
      %400 = vmatprep.subr.bf16.mxu0 0
      %401 = vmatpush2.bf16.msra.mxu0 0
      %402 = vmatprep.subr.bf16.mxu0 0
      %403 = vmatpush2.bf16.msra.mxu0 0
      %404 = vmatprep.subr.bf16.mxu0 0
      %405 = vmatpush2.bf16.msra.mxu0 0
      %406 = vmatprep.subr.bf16.mxu0 0
      %407 = vmatpush2.bf16.msra.mxu0 0
      %408 = vmatprep.subr.bf16.mxu0 0
      %409 = vmatpush2.bf16.msra.mxu0 0
      %410 = vmatprep.mubr.bf16.mxu0 0
      %411 = vmatmul.mubr.bf16.gmra.mxu0 %v377
      %v412 = vpop.f32.mrf.mxu0
      %v413 = vadd.f32 0.0, %v412
      %v414 = vpop.f32.mrf.mxu0
      %v415 = vpop.f32.mrf.mxu0
      %v416 = vpop.f32.mrf.mxu0
      %417 = vdwg.mxu0
      %v418 = vadd.f32 %v376, %v413
      %v419 = vtanh.pop %v418
      %s420 = scalar_lea.vmem %s0, 56
      %v421 = vld [vmem:[%s420] sm:$0xff]
      %v422 = vpack.c.bf16 %v419, %v419
      %423 = vmatprep.subr.bf16.mxu0 0
      %424 = vmatpush1.bf16.msra.mxu0 %v99
      %425 = vmatprep.subr.bf16.mxu0 0
      %426 = vmatpush1.bf16.msra.mxu0 %v98
      %427 = vmatprep.subr.bf16.mxu0 0
      %428 = vmatpush1.bf16.msra.mxu0 %v97
      %429 = vmatprep.subr.bf16.mxu0 0
      %430 = vmatpush1.bf16.msra.mxu0 %v96
      %431 = vmatprep.subr.bf16.mxu0 0
      %432 = vmatpush1.bf16.msra.mxu0 %v95
      %433 = vmatprep.subr.bf16.mxu0 0
      %434 = vmatpush1.bf16.msra.mxu0 %v94
      %435 = vmatprep.subr.bf16.mxu0 0
      %436 = vmatpush1.bf16.msra.mxu0 %v93
      %437 = vmatprep.subr.bf16.mxu0 0
      %438 = vmatpush1.bf16.msra.mxu0 %v92
      %439 = vmatprep.subr.bf16.mxu0 0
      %440 = vmatpush2.bf16.msra.mxu0 0
      %441 = vmatprep.subr.bf16.mxu0 0
      %442 = vmatpush2.bf16.msra.mxu0 0
      %443 = vmatprep.subr.bf16.mxu0 0
      %444 = vmatpush2.bf16.msra.mxu0 0
      %445 = vmatprep.subr.bf16.mxu0 0
      %446 = vmatpush2.bf16.msra.mxu0 0
      %447 = vmatprep.subr.bf16.mxu0 0
      %448 = vmatpush2.bf16.msra.mxu0 0
      %449 = vmatprep.subr.bf16.mxu0 0
      %450 = vmatpush2.bf16.msra.mxu0 0
      %451 = vmatprep.subr.bf16.mxu0 0
      %452 = vmatpush2.bf16.msra.mxu0 0
      %453 = vmatprep.subr.bf16.mxu0 0
      %454 = vmatpush2.bf16.msra.mxu0 0
      %455 = vmatprep.mubr.bf16.mxu0 0
      %456 = vmatmul.mubr.bf16.gmra.mxu0 %v422
      %v457 = vpop.f32.mrf.mxu0
      %v458 = vadd.f32 0.0, %v457
      %v459 = vpop.f32.mrf.mxu0
      %v460 = vpop.f32.mrf.mxu0
      %v461 = vpop.f32.mrf.mxu0
      %462 = vdwg.mxu0
      %v463 = vadd.f32 %v421, %v458
      %v464 = vtanh.pop %v463
      %465 = vst [vmem:[#allocation2] sm:$0xff] %v464
    $region29: #{rnn_forward.1} parent=1 // pred_fallthru
      _
    // Predicated region
    $region30: #{rnn_forward.1} parent=1 // pred_check
      %p466 = pneg %p32
    $region31: #{rnn_forward.1} parent=1 // pred_check_branch
      %468 = sbr.rel (%p466) target = $region33
    $region32: #{rnn_forward.1} parent=1 // pred_region
      %v469 = vld [vmem:[#allocation2] sm:$0xff]
      %v470 = vld [vmem:[%s2] sm:$0xff]
      %v471 = vld [vmem:[%s2 + $0x8] sm:$0xff]
      %v472 = vld [vmem:[%s2 + $0x10] sm:$0xff]
      %v473 = vld [vmem:[%s2 + $0x18] sm:$0xff]
      %v474 = vld [vmem:[%s2 + $0x20] sm:$0xff]
      %v475 = vld [vmem:[%s2 + $0x28] sm:$0xff]
      %v476 = vld [vmem:[%s2 + $0x30] sm:$0xff]
      %v477 = vld [vmem:[%s2 + $0x38] sm:$0xff]
      %v478 = vld [vmem:[%s2 + $0x40] sm:$0xff]
      %v479 = vld [vmem:[%s2 + $0x48] sm:$0xff]
      %v480 = vld [vmem:[%s2 + $0x50] sm:$0xff]
      %v481 = vld [vmem:[%s2 + $0x58] sm:$0xff]
      %v482 = vld [vmem:[%s2 + $0x60] sm:$0xff]
      %v483 = vld [vmem:[%s2 + $0x68] sm:$0xff]
      %v484 = vld [vmem:[%s2 + $0x70] sm:$0xff]
      %v485 = vld [vmem:[%s2 + $0x78] sm:$0xff]
      %v486 = vld [vmem:[%s3] sm:$0x1]
      %v488 = vlaneseq
      %v489 = vshrl.u32 %v488, 7
      %v490 = vsub.s32 0, %v489
      %v491 = vrot.slane %v486, %v490
      %493 = vmatprep.subr.mxu0 0.0
      %494 = vmatpush1.msra.mxu0 %v485
      %495 = vmatprep.subr.mxu0 0.0
      %496 = vmatpush1.msra.mxu0 %v484
      %497 = vmatprep.subr.mxu0 0.0
      %498 = vmatpush1.msra.mxu0 %v483
      %499 = vmatprep.subr.mxu0 0.0
      %500 = vmatpush1.msra.mxu0 %v482
      %501 = vmatprep.subr.mxu0 0.0
      %502 = vmatpush1.msra.mxu0 %v481
      %503 = vmatprep.subr.mxu0 0.0
      %504 = vmatpush1.msra.mxu0 %v480
      %505 = vmatprep.subr.mxu0 0.0
      %506 = vmatpush1.msra.mxu0 %v479
      %507 = vmatprep.subr.mxu0 0.0
      %508 = vmatpush1.msra.mxu0 %v478
      %509 = vmatprep.subr.mxu0 0.0
      %510 = vmatpush1.msra.mxu0 %v477
      %511 = vmatprep.subr.mxu0 0.0
      %512 = vmatpush1.msra.mxu0 %v476
      %513 = vmatprep.subr.mxu0 0.0
      %514 = vmatpush1.msra.mxu0 %v475
      %515 = vmatprep.subr.mxu0 0.0
      %516 = vmatpush1.msra.mxu0 %v474
      %517 = vmatprep.subr.mxu0 0.0
      %518 = vmatpush1.msra.mxu0 %v473
      %519 = vmatprep.subr.mxu0 0.0
      %520 = vmatpush1.msra.mxu0 %v472
      %521 = vmatprep.subr.mxu0 0.0
      %522 = vmatpush1.msra.mxu0 %v471
      %523 = vmatprep.subr.mxu0 0.0
      %524 = vmatpush1.msra.mxu0 %v470
      %525 = vmatprep.subr.mxu0 0.0
      %526 = vmatpush2.msra.mxu0 0.0
      %527 = vmatprep.subr.mxu0 0.0
      %528 = vmatpush2.msra.mxu0 0.0
      %529 = vmatprep.subr.mxu0 0.0
      %530 = vmatpush2.msra.mxu0 0.0
      %531 = vmatprep.subr.mxu0 0.0
      %532 = vmatpush2.msra.mxu0 0.0
      %533 = vmatprep.subr.mxu0 0.0
      %534 = vmatpush2.msra.mxu0 0.0
      %535 = vmatprep.subr.mxu0 0.0
      %536 = vmatpush2.msra.mxu0 0.0
      %537 = vmatprep.subr.mxu0 0.0
      %538 = vmatpush2.msra.mxu0 0.0
      %539 = vmatprep.subr.mxu0 0.0
      %540 = vmatpush2.msra.mxu0 0.0
      %541 = vmatprep.subr.mxu0 0.0
      %542 = vmatpush2.msra.mxu0 0.0
      %543 = vmatprep.subr.mxu0 0.0
      %544 = vmatpush2.msra.mxu0 0.0
      %545 = vmatprep.subr.mxu0 0.0
      %546 = vmatpush2.msra.mxu0 0.0
      %547 = vmatprep.subr.mxu0 0.0
      %548 = vmatpush2.msra.mxu0 0.0
      %549 = vmatprep.subr.mxu0 0.0
      %550 = vmatpush2.msra.mxu0 0.0
      %551 = vmatprep.subr.mxu0 0.0
      %552 = vmatpush2.msra.mxu0 0.0
      %553 = vmatprep.subr.mxu0 0.0
      %554 = vmatpush2.msra.mxu0 0.0
      %555 = vmatprep.subr.mxu0 0.0
      %556 = vmatpush2.msra.mxu0 0.0
      %557 = vmatprep.mubr.f32.mxu0 0.0
      %558 = vmatmul.mubr.f32.gmra.mxu0 %v469
      %v559 = vpop.f32.mrf.mxu0
      %v560 = vadd.f32 %v491, %v559
      %v561 = vpop.f32.mrf.mxu0
      %562 = vdwg.mxu0
      %563 = vst [vmem:[%s4] sm:$0xff] %v560
    $region33: #{rnn_forward.1} parent=1 // pred_fallthru
      _
    // Predicated region
    $region34: #{rnn_forward.1} parent=1 // pred_check
      _
    $region35: #{rnn_forward.1} parent=1 // pred_check_branch
      %565 = sbr.rel (0) target = $region37
    $region36: #{rnn_forward.1} parent=1 // pred_region
      _
    $region37: #{rnn_forward.1} parent=1 // pred_fallthru
      _
    // Predicated region
    $region38: #{rnn_forward.1} parent=1 // pred_check
      _
    $region39: #{rnn_forward.1} parent=1 // pred_check_branch
      %567 = sbr.rel (0) target = $region41
    $region40: #{rnn_forward.1} parent=1 // pred_region
      _
    $region41: #{rnn_forward.1} parent=1 // pred_fallthru
      _
    %568 = vsyncpa [#allocation4], 1

</llo_original>
